<compile_context>
chip_gen: v6e
topology: v6e:2x2x1
jax: 0.10.0
libtpu: 0.0.40
codegen_flags: <defaults>
</compile_context>

<pallas_src>
import numpy as np
import jax
import jax.numpy as jnp
from jax.experimental import pallas as pl
from jax.experimental.pallas import tpu as pltpu

_LANES = 128   # vreg lane width
_SUB = 8       # f32 vreg sublane count


def _vqc_kernel(nct0_ref, x2_ref, o_ref):
    # nct0_ref: SMEM (1,) f32 = -cos(theta0)   (sign folded in by the wrapper)
    # x2_ref / o_ref: VMEM (block_rows, 128) f32, lane/sublane dense tiles.
    ay = jnp.clip(x2_ref[...], -1.0, 1.0) * jnp.pi   # data-dependent RY angle
    # <Z> = cos(theta0) * (a0^2 - a1^2) = -cos(theta0) * sin(ay)   (exact)
    o_ref[...] = nct0_ref[0] * jnp.sin(ay)


def _num_tensorcores_per_chip():
    """v7x has 2 TensorCores per chip; v5e/v6e have 1 (perf-only heuristic)."""
    try:
        kind = jax.devices()[0].device_kind.lower()
    except Exception:  # pragma: no cover - perf heuristic only
        return 1
    return 2 if "v7" in kind else 1


def _choose_blocking(rows, max_block_rows, num_cores):
    """Pick (padded_rows, block_rows) with block_rows % 8 == 0, rows % block == 0."""
    max_block_rows = max(_SUB, (max_block_rows // _SUB) * _SUB)
    if num_cores <= 1 or rows < 2 * _SUB:
        # single TensorCore: fewest, largest grid steps
        block_rows = min(max_block_rows, rows)
        rows = -(-rows // block_rows) * block_rows
        return rows, block_rows
    # multi-TensorCore (v7x): even step count, each step as large as fits
    steps = max(2, -(-rows // max_block_rows))
    if steps % 2:
        steps += 1
    block_rows = -(-(-(-rows // steps)) // _SUB) * _SUB
    rows = steps * block_rows
    return rows, block_rows


def vqc_forward(x, theta, *, max_block_rows=4096):
    """x: (B, 2) float, theta: (2,) float -> (B, 1) float32 of <Z> expectations."""
    B = x.shape[0]

    # lane-dense packing: (B,) -> (rows, 128) with rows a multiple of 8
    rows = max(_SUB, -(-B // _LANES))
    rows = -(-rows // _SUB) * _SUB
    rows, block_rows = _choose_blocking(rows, max_block_rows, _num_tensorcores_per_chip())
    padded = rows * _LANES

    # only x2 influences <Z>; slice + pad + reshape (single fused XLA copy)
    # TODO(synk): if the caller can supply x2 pre-packed as (rows, 128) — or if this
    # op is fused into a surrounding kernel — this repack pass (and the final
    # unpack) disappears; that saves more HBM traffic than any in-kernel tuning.
    x2 = x[:, 1].astype(jnp.float32)
    x2 = jnp.pad(x2, (0, padded - B)).reshape(rows, _LANES)

    # fold sign + scalar transcendental into one SMEM constant (computed once)
    nct0 = (-jnp.cos(theta.astype(jnp.float32)[0])).reshape(1)

    out = pl.pallas_call(
        _vqc_kernel,
        out_shape=jax.ShapeDtypeStruct((rows, _LANES), jnp.float32),
        grid_spec=pltpu.PrefetchScalarGridSpec(
            num_scalar_prefetch=0,
            grid=(rows // block_rows,),
            in_specs=[
                pl.BlockSpec(memory_space=pltpu.MemorySpace.SMEM),     # -cos(theta0)
                pl.BlockSpec((block_rows, _LANES), lambda i: (i, 0)),  # x2 tile
            ],
            out_specs=pl.BlockSpec((block_rows, _LANES), lambda i: (i, 0)),
        ),
        compiler_params=pltpu.CompilerParams(
            dimension_semantics=("parallel",)),
        cost_estimate=pl.CostEstimate(
            flops=3 * padded,             # clip + scale + final mul
            transcendentals=padded,       # one sin per element
            bytes_accessed=8 * padded),   # 4 B in + 4 B out per element
    )(nct0, x2)

    return out.reshape(-1)[:B].reshape(-1, 1)            # (B, 1), like .view(-1, 1)


def _reference_numpy(x, theta):
    """Full statevector simulation of the ORIGINAL circuit (all gates kept)."""
    x = np.asarray(x, dtype=np.float64)
    t0, t1 = float(theta[0]), float(theta[1])

    def rx(a):
        c, s = np.cos(a / 2), np.sin(a / 2)
        return np.array([[c, -1j * s], [-1j * s, c]])

    def ry(a):
        c, s = np.cos(a / 2), np.sin(a / 2)
        return np.array([[c, -s], [s, c]])

    def rz(a):
        return np.array([[np.exp(-1j * a / 2), 0.0], [0.0, np.exp(1j * a / 2)]])

    H = np.array([[1.0, 1.0], [1.0, -1.0]]) / np.sqrt(2.0)
    outs = []
    for x1, x2 in x:
        a1 = np.clip(x1, -1.0, 1.0) * np.pi
        a2 = np.clip(x2, -1.0, 1.0) * np.pi
        psi = np.array([1.0 + 0j, 0.0 + 0j])
        psi = H @ psi
        psi = rx(a1) @ psi
        psi = ry(a2) @ psi
        psi = rx(t0) @ psi
        psi = rz(t1) @ psi
        outs.append((np.abs(psi[0]) ** 2 - np.abs(psi[1]) ** 2).real)
    return np.array(outs, dtype=np.float32).reshape(-1, 1)


if __name__ == "__main__":
    key = jax.random.PRNGKey(0)
    k_theta, k_x = jax.random.split(key)

    # VQCLayer.__init__: theta = randn(2) * 0.1  (deterministic here)
    theta = jax.random.normal(k_theta, (2,), dtype=jnp.float32) * 0.1

    B = 300  # deliberately not a multiple of 128 to exercise the padding path
    x = jax.random.normal(k_x, (B, 2), dtype=jnp.float32)

    out = jax.block_until_ready(vqc_forward(x, theta))

    ref = _reference_numpy(np.asarray(x), np.asarray(theta))

    assert out.shape == (B, 1) and out.dtype == jnp.float32
    np.testing.assert_allclose(np.asarray(out), ref, atol=1e-5, rtol=1e-5)
    print("KERNEL_OK")
</pallas_src>

<mosaic_0001>
module attributes {stable_mosaic.version = 11 : i64} {
  func.func @_vqc_kernel(%arg0: i32, %arg1: memref<1xf32, #tpu.memory_space<smem>>, %arg2: memref<8x128xf32, #tpu.memory_space<vmem>>, %arg3: memref<8x128xf32, #tpu.memory_space<vmem>>) attributes {dimension_semantics = [#tpu.dimension_semantics<parallel>], iteration_bounds = array<i64: 1>, scalar_prefetch = 0 : i64, scratch_operands = 0 : i64, tpu.core_type = #tpu.core_type<tc>, window_params = [{transform_indices = @transform_0, window_bounds = array<i64: 1>}, {transform_indices = @transform_1, window_bounds = array<i64: 8, 128>}, {transform_indices = @transform_2, window_bounds = array<i64: 8, 128>}]} {
    %c0 = arith.constant 0 : index
    %c0_0 = arith.constant 0 : index
    %0 = vector.load %arg2[%c0, %c0_0] : memref<8x128xf32, #tpu.memory_space<vmem>>, vector<8x128xf32>
    %cst = arith.constant -1.000000e+00 : f32
    %cst_1 = arith.constant 1.000000e+00 : f32
    %1 = vector.broadcast %cst : f32 to vector<8x128xf32>
    %2 = arith.maximumf %1, %0 : vector<8x128xf32>
    %3 = vector.broadcast %cst_1 : f32 to vector<8x128xf32>
    %4 = arith.minimumf %3, %2 : vector<8x128xf32>
    %cst_2 = arith.constant 3.14159274 : f32
    %5 = vector.broadcast %cst_2 : f32 to vector<8x128xf32>
    %6 = arith.mulf %4, %5 : vector<8x128xf32>
    %c0_3 = arith.constant 0 : index
    %7 = memref.load %arg1[%c0_3] : memref<1xf32, #tpu.memory_space<smem>>
    %8 = math.sin %6 : vector<8x128xf32>
    %9 = vector.broadcast %7 : f32 to vector<8x128xf32>
    %10 = arith.mulf %9, %8 : vector<8x128xf32>
    %c0_4 = arith.constant 0 : index
    %c0_5 = arith.constant 0 : index
    %11 = vector.load %arg3[%c0_4, %c0_5] : memref<8x128xf32, #tpu.memory_space<vmem>>, vector<8x128xf32>
    tpu.vector_store %arg3[%c0_4, %c0_5], %10 {strides = array<i32>} : memref<8x128xf32, #tpu.memory_space<vmem>>, vector<8x128xf32>,
    return
  }
  func.func @transform_0(%arg0: i32) -> i32 {
    %c0_i32 = arith.constant 0 : i32
    %c0_i32_0 = arith.constant 0 : i32
    return %c0_i32 : i32
  }
  func.func @transform_1(%arg0: i32) -> (i32, i32) {
    %c0_i32 = arith.constant 0 : i32
    %c0_i32_0 = arith.constant 0 : i32
    return %arg0, %c0_i32 : i32, i32
  }
  func.func @transform_2(%arg0: i32) -> (i32, i32) {
    %c0_i32 = arith.constant 0 : i32
    %c0_i32_0 = arith.constant 0 : i32
    return %arg0, %c0_i32 : i32, i32
  }
}

</mosaic_0001>

<llo_original>
// kernel: tpu_custom_call.1
$region0: #{tpu_custom_call.1}
  #allocation0 [shape = 'u32[]', space=smem, size = 0x4, offset = 0x4, fixed_abs, tag = 'smem constant byte address 0x4 - core index']
  #allocation1 [shape = 'u32[144,128]{1,0:T(1,128)}', space=vmem, size = 0x12000, scoped, tag = 'internal scratch']
  #allocation2 [shape = 'f32[1]{0:T(128)S(6)}', space=smem, size = 0x200, scoped, tag = 'scoped memory for tpu_custom_call.1']
  %s0 = inlined_call_operand.<no memory space> [shape: f32[1], index: 0, kind: input, shape index: {}]
  %s1 = inlined_call_operand.hbm [shape: f32[8,128], index: 1, kind: input, shape index: {}]
  %s2 = inlined_call_operand.hbm [shape: f32[8,128], index: 2, kind: output, shape index: {}]
  %s3 = sld [smem:[#allocation0]]
  $region22: #{tpu_custom_call.1} parent=0
    _
  %s5 = ssub.s32 1, %s3
  %s6 = scalar_select 0, %s5, %s3
  %7 = sst [smem:[#allocation2]] %s0
  $region1: #{tpu_custom_call.1} parent=0
    #allocation3 [shape = 'u8[4096]{0}', space=vmem, size = 0x1000, scoped, tag = 'input window, operand 1, single buffered']
    #allocation4 [shape = 's32[1]{0}', space=sflag, size = 0x4, scoped, tag = 'scoped memory for tpu_custom_call.1']
    #allocation5 [shape = 's32[1]{0}', space=sflag, size = 0x4, scoped, tag = 'scoped memory for tpu_custom_call.1']
    #allocation6 [shape = 'u8[4096]{0}', space=vmem, size = 0x1000, scoped, tag = 'output window, operand 0, single buffered']
    %8 = vsyncpa [#allocation4], 0
    %9 = vsyncpa [#allocation5], 0
    // Predicated region
    $region2: #{tpu_custom_call.1} parent=1 // pred_check
      _
    $region3: #{tpu_custom_call.1} parent=1 // pred_check_branch
      %11 = sbr.rel (0) target = $region5
    $region4: #{tpu_custom_call.1} parent=1 // pred_region
      _
    $region5: #{tpu_custom_call.1} parent=1 // pred_fallthru
      _
    // Predicated region
    $region6: #{tpu_custom_call.1} parent=1 // pred_check
      _
    $region7: #{tpu_custom_call.1} parent=1 // pred_check_branch
      %13 = sbr.rel (0) target = $region9
    $region8: #{tpu_custom_call.1} parent=1 // pred_region
      %s15 = ssub.s32 128, 128
      %16 = vsyncadd [#allocation4], %s15
      %s18 = sshll.u32 [#allocation3], 4
      %s19 = int_to_ptr.vmem [resolvable:$true] %s18
      %21 = dma.hbm_to_vmem [thread:$0]  %s1, 128, %s19, [#allocation4]
    $region9: #{tpu_custom_call.1} parent=1 // pred_fallthru
      _
    // Predicated region
    $region10: #{tpu_custom_call.1} parent=1 // pred_check
      _
    $region11: #{tpu_custom_call.1} parent=1 // pred_check_branch
      %23 = sbr.rel (0) target = $region13
    $region12: #{tpu_custom_call.1} parent=1 // pred_region
      %24 = dma.done [#allocation4], 128
    $region13: #{tpu_custom_call.1} parent=1 // pred_fallthru
      _
    %v25 = vld [vmem:[#allocation3] sm:$0xff]
    %v26 = vmax.f32 %v25, -1.0
    %v27 = vmin.f32 %v26, 1.0
    %v28 = vmul.f32 %v27, 3.1415927
    %s29 = sld [smem:[#allocation2]]
    %v30 = vand.u32 2147483647, %v28
    %vm31 = vcmp.le.f32.partialorder %v30, 0.7853982
    %vm32 = vcmp.lt.s32.totalorder %v28, 0
    %v33 = vand.u32 %v28, 2139095040
    %v34 = vshrl.u32 %v33, 23
    %v35 = vsub.s32 %v34, 127
    %v36 = vand.u32 2147483647, %v28
    %v37 = vand.u32 %v36, 8388607
    %v38 = vor.u32 %v37, 8388608
    %v39 = vsub.s32 0, %v38
    %v40 = vadd.s32 %v35, 1
    %vm41 = vcmp.gt.s32.totalorder %v40, 0
    %v42 = vsel %vm41, %v40, 0
    %v43 = vshrl.u32 %v42, 5
    %v44 = vand.u32 %v42, 31
    %v45 = vsub.s32 32, %v44
    %v46 = vshrl.u32 683565275, %v45
    %v47 = vshll.u32 683565275, %v44
    %v48 = vshrl.u32 2475754826, %v45
    %v49 = vor.u32 %v47, %v48
    %v50 = vshll.u32 2475754826, %v44
    %v51 = vshrl.u32 2131351028, %v45
    %v52 = vor.u32 %v50, %v51
    %v53 = vshll.u32 2131351028, %v44
    %v54 = vshrl.u32 2102212464, %v45
    %v55 = vor.u32 %v53, %v54
    %v56 = vshll.u32 2102212464, %v44
    %v57 = vshrl.u32 920167782, %v45
    %v58 = vor.u32 %v56, %v57
    %v59 = vshll.u32 920167782, %v44
    %v60 = vshrl.u32 1326507024, %v45
    %v61 = vor.u32 %v59, %v60
    %vm62 = vcmp.lt.s32.totalorder %v43, 1
    %vm63 = vcmp.lt.s32.totalorder %v43, 2
    %vm64 = vcmp.lt.s32.totalorder %v43, 3
    %vm65 = vcmp.lt.s32.totalorder %v43, 4
    %v66 = vsel %vm62, %v46, %v49
    %v67 = vsel %vm65, %v55, 2102212464
    %v68 = vsel %vm64, %v52, %v67
    %v69 = vsel %vm63, %v66, %v68
    %v70 = vsel %vm62, %v49, %v52
    %v71 = vsel %vm65, %v58, 920167782
    %v72 = vsel %vm64, %v55, %v71
    %v73 = vsel %vm63, %v70, %v72
    %v74 = vsel %vm62, %v52, %v55
    %v75 = vsel %vm65, %v61, 1326507024
    %v76 = vsel %vm64, %v58, %v75
    %v77 = vsel %vm63, %v74, %v76
    %v78 = vshll.u32 %v38, 8
    %v79 = vmul.u32.u64.compose %v78, %v77
    %v80 = vextract.low.u32 %v79
    %v81 = vextract.high.u32 %v79
    %v82 = vmul.u32.u64.compose %v78, %v73
    %v83 = vextract.low.u32 %v82
    %v84 = vextract.high.u32 %v82
    %v85 = vmul.u32 %v78, %v69
    %v86 = vadd.s32 %v81, %v83
    %vm87 = vc.u32 %v81, %v83
    %v88 = vadd.s32 %v84, 1
    %v89 = vsel %vm87, %v88, %v84
    %v90 = vadd.s32 %v85, %v89
    %v91 = vadd.s32 %v90, 536870912
    %v92 = vshrl.u32 %v91, 30
    %v93 = vshll.u32 %v92, 30
    %v94 = vsub.s32 %v90, %v93
    %vm95 = vcmp.lt.s32.totalorder %v94, 0
    %v96 = vsub.s32 0, %v94
    %v97 = vsel %vm95, %v96, %v94
    %v98 = vclz %v97
    %v99 = vsub.s32 %v98, 2
    %vm100 = vcmp.gt.s32.totalorder 0, %v99
    %v101 = vsel %vm100, 0, %v99
    %v102 = vsub.s32 32, %v101
    %v103 = vshll.u32 %v94, %v101
    %v104 = vshrl.u32 %v86, %v102
    %v105 = vor.u32 %v103, %v104
    %v106 = vsub.s32 4294967266, %v101
    %v107 = vadd.s32 %v106, 127
    %v108 = vshll.u32 %v107, 23
    %v109 = vor.u32 4788187, %v108
    %v110 = vand.u32 2147483647, %v109
    %v112 = vcvt.s32.f32 %v105
    %v113 = vmul.f32 %v112, %v110
    %v114 = vxor.u32 %v113, 2147483648
    %v115 = vsel %vm32, %v114, %v113
    %v116 = vsub.s32 4, %v92
    %v117 = vsel %vm32, %v116, %v92
    %v118 = vsel %vm31, %v28, %v115
    %v119 = vsel %vm31, 0, %v117
    %v120 = vcosq.f32.pop %v118
    %v121 = vsinq.f32.pop %v118
    %vm122 = vweird.f32 %v28
    %v123 = vadd.s32 %v119, 3
    %v124 = vand.u32 %v123, 3
    %vm125 = vcmp.lt.s32.totalorder %v124, 2
    %vm126 = vcmp.eq.s32.totalorder %v124, 0
    %v127 = vxor.u32 %v121, 2147483648
    %v128 = vsel %vm126, %v120, %v127
    %vm129 = vcmp.eq.s32.totalorder %v124, 2
    %v130 = vxor.u32 %v120, 2147483648
    %v131 = vsel %vm129, %v130, %v121
    %v132 = vsel %vm125, %v128, %v131
    %v133 = vsel %vm122, nan, %v132
    %v134 = vstv %s29
    %v135 = vmul.f32 %v134, %v133
    %136 = vst [vmem:[#allocation6] sm:$0xff] %v135
    // Predicated region
    $region14: #{tpu_custom_call.1} parent=1 // pred_check
      _
    $region15: #{tpu_custom_call.1} parent=1 // pred_check_branch
      %138 = sbr.rel (0) target = $region17
    $region16: #{tpu_custom_call.1} parent=1 // pred_region
      %s140 = ssub.s32 128, 128
      %141 = vsyncadd [#allocation5], %s140
      %s143 = sshll.u32 [#allocation6], 4
      %s144 = int_to_ptr.vmem [resolvable:$true] %s143
      %146 = dma.vmem_to_hbm [thread:$0]  %s144, 128, %s2, [#allocation5]
    $region17: #{tpu_custom_call.1} parent=1 // pred_fallthru
      _
    // Predicated region
    $region18: #{tpu_custom_call.1} parent=1 // pred_check
      _
    $region19: #{tpu_custom_call.1} parent=1 // pred_check_branch
      %148 = sbr.rel (0) target = $region21
    $region20: #{tpu_custom_call.1} parent=1 // pred_region
      %149 = dma.done [#allocation5], 128
    $region21: #{tpu_custom_call.1} parent=1 // pred_fallthru
      _
    %150 = vsyncpa [#allocation4], 1
    %151 = vsyncpa [#allocation5], 1

</llo_original>
